<compile_context>
chip_gen: v7x
topology: tpu7x:2x2x1
jax: 0.10.0
libtpu: 0.0.40
codegen_flags: <defaults>
</compile_context>

<pallas_src>
import jax
import jax.numpy as jnp
from jax.experimental import pallas as pl
from jax.experimental.pallas import tpu as pltpu

LEAKY_SLOPE = 0.01  # torch.nn.LeakyReLU default negative_slope


# --------------------------------------------------------------------------- #
# Kernels
# --------------------------------------------------------------------------- #
def mlp_kernel_resident(x_ref, w1_ref, b1_ref, w2_ref, b2_ref, o_ref):
    """Whole MLP per batch tile; W1/W2/b1/b2 fully resident in VMEM."""
    x = x_ref[...].astype(w1_ref.dtype)                       # in-kernel cast (cheap)
    h = jnp.dot(x, w1_ref[...], preferred_element_type=jnp.float32)
    h = h + b1_ref[...]                                        # f32 bias add
    h = jnp.maximum(h, LEAKY_SLOPE * h)                        # LeakyReLU (vmul+vmax)
    out = jnp.dot(h.astype(w2_ref.dtype), w2_ref[...],
                  preferred_element_type=jnp.float32)
    o_ref[...] = (out + b2_ref[...]).astype(o_ref.dtype)


def mlp_kernel_htiled(x_ref, w1_ref, b1_ref, w2_ref, b2_ref, o_ref, acc_ref):
    """H-tiled variant: grid=(batch_tiles, h_tiles); f32 accumulator scratch."""
    j = pl.program_id(1)

    @pl.when(j == 0)
    def _():
        acc_ref[...] = jnp.zeros_like(acc_ref)

    x = x_ref[...].astype(w1_ref.dtype)
    h = jnp.dot(x, w1_ref[...], preferred_element_type=jnp.float32)
    h = h + b1_ref[...]
    h = jnp.maximum(h, LEAKY_SLOPE * h)
    acc_ref[...] += jnp.dot(h.astype(w2_ref.dtype), w2_ref[...],
                            preferred_element_type=jnp.float32)

    @pl.when(j == pl.num_programs(1) - 1)
    def _():
        o_ref[...] = (acc_ref[...] + b2_ref[...]).astype(o_ref.dtype)


# --------------------------------------------------------------------------- #
# Helpers
# --------------------------------------------------------------------------- #
def _round_up(n, m):
    return ((n + m - 1) // m) * m


def _cdiv(a, b):
    return -(-a // b)


def _vmem_limit_bytes():
    """Pick a scoped VMEM limit per TPU generation (conservative fallback)."""
    cap = None
    try:
        info = pltpu.get_tpu_info()
        cap = getattr(info, "vmem_capacity_bytes", None) or getattr(
            info, "vmem_size_bytes", None)
    except Exception:
        cap = None
    if cap is None:
        return 32 * 1024 * 1024          # safe everywhere
    if cap <= 64 * 1024 * 1024:          # v7x: 64 MiB physical per TC
        return 48 * 1024 * 1024
    return 96 * 1024 * 1024              # v5e / v6e: 128 MiB physical


def _pick_batch_tile(B, block_b):
    # >= 2 parallel tiles when the batch can be split (both v7x TensorCores);
    # TB rounded to 16 rows (bf16 (16,128) sublane packing), tail < one tile.
    min_tiles = 2 if B >= 32 else 1
    n_tiles = max(min_tiles, _cdiv(B, block_b))
    return _round_up(_cdiv(B, n_tiles), 16)


def _shrink_tb_for_vmem(TB, D_in_p, H_cols, D_out_p, resident_bytes,
                        out_itemsize, vmem_limit):
    budget = int(0.8 * vmem_limit)

    def step_bytes(tb):
        return (2 * tb * D_in_p * 4                # double-buffered x tiles (f32 worst case)
                + 2 * tb * D_out_p * out_itemsize  # double-buffered out tiles
                + 2 * tb * H_cols * 4)             # f32 hidden intermediates + headroom

    while TB > 16 and resident_bytes + step_bytes(TB) > budget:
        TB = max(16, _round_up(TB // 2, 16))
    return TB


def prepare_mlp_params(w1, b1, w2, b2, *, mxu_dtype=jnp.bfloat16):
    """One-time (init-time) padding + casting of MLP parameters.

    w1: [D_in, H], w2: [H, D_out] (pre-transposed vs PyTorch's [out, in]);
    b1: [H] or [1, H]; b2: [D_out] or [1, D_out].
    """
    D_in, H = w1.shape
    H2, D_out = w2.shape
    assert H2 == H, "w1/w2 hidden dims mismatch"
    b1 = jnp.asarray(b1).reshape(1, -1)
    b2 = jnp.asarray(b2).reshape(1, -1)

    D_in_p = _round_up(D_in, 128)
    H_p = _round_up(H, 128)
    D_out_p = _round_up(D_out, 128)

    w1_p = jnp.zeros((D_in_p, H_p), mxu_dtype).at[:D_in, :H].set(w1.astype(mxu_dtype))
    b1_p = jnp.zeros((1, H_p), jnp.float32).at[:, :H].set(b1.astype(jnp.float32))
    w2_p = jnp.zeros((H_p, D_out_p), mxu_dtype).at[:H, :D_out].set(w2.astype(mxu_dtype))
    b2_p = jnp.zeros((1, D_out_p), jnp.float32).at[:, :D_out].set(b2.astype(jnp.float32))

    return {"w1": w1_p, "b1": b1_p, "w2": w2_p, "b2": b2_p,
            "dims": (D_in, H, D_out), "mxu_dtype": mxu_dtype}


# --------------------------------------------------------------------------- #
# Forward pass
# --------------------------------------------------------------------------- #
def mlp_pallas(x, params, *, block_b=1024, out_dtype=None,
               h_tile=None, force_h_tiled=False):
    """x: [B, D_in]; params from prepare_mlp_params (padded/cast once)."""
    D_in, H, D_out = params["dims"]
    w1_p, b1_p, w2_p, b2_p = params["w1"], params["b1"], params["w2"], params["b2"]
    mxu_dtype = params["mxu_dtype"]
    D_in_p, H_p = w1_p.shape
    D_out_p = w2_p.shape[1]

    B = x.shape[0]
    assert x.shape[1] == D_in, "x feature dim mismatch"
    out_dtype = out_dtype if out_dtype is not None else x.dtype
    out_itemsize = jnp.dtype(out_dtype).itemsize

    vmem_limit = _vmem_limit_bytes()
    weight_bytes = sum(int(a.size) * a.dtype.itemsize
                       for a in (w1_p, b1_p, w2_p, b2_p))
    # Fall back to H-tiling when (possibly double-buffered) resident weights
    # would eat more than ~half the scoped VMEM budget.
    use_tiled = force_h_tiled or (2 * weight_bytes > vmem_limit // 2)

    TB = _pick_batch_tile(B, block_b)

    if use_tiled:
        TH = max(128, _round_up(h_tile if h_tile is not None else min(H_p, 512), 128))
        TH = min(TH, H_p)
        while H_p % TH != 0:      # TH must evenly tile the padded hidden dim
            TH -= 128
        resident_bytes = (2 * (D_in_p * TH + TH * D_out_p)
                          * jnp.dtype(mxu_dtype).itemsize
                          + (H_p + D_out_p) * 4)
        TB = _shrink_tb_for_vmem(TB, D_in_p, TH, D_out_p, resident_bytes,
                                 out_itemsize, vmem_limit)
    else:
        TH = H_p
        TB = _shrink_tb_for_vmem(TB, D_in_p, H_p, D_out_p, weight_bytes,
                                 out_itemsize, vmem_limit)

    B_p = _round_up(B, TB)
    grid_b = B_p // TB

    # Per-call x handling: fast path (no copy) when already aligned; otherwise
    # pad and cast to the MXU dtype in one pass.
    if (B_p != B) or (D_in_p != D_in):
        x_in = jnp.zeros((B_p, D_in_p), mxu_dtype).at[:B, :D_in].set(
            x.astype(mxu_dtype))
    else:
        x_in = x  # cast to bf16 inside the kernel

    out_shape = jax.ShapeDtypeStruct((B_p, D_out_p), out_dtype)

    if use_tiled:
        out_p = pl.pallas_call(
            mlp_kernel_htiled,
            out_shape=out_shape,
            grid=(grid_b, H_p // TH),
            in_specs=[
                pl.BlockSpec((TB, D_in_p), lambda i, j: (i, 0)),    # x
                pl.BlockSpec((D_in_p, TH), lambda i, j: (0, j)),    # W1 h-tile
                pl.BlockSpec((1, TH), lambda i, j: (0, j)),         # b1 h-tile
                pl.BlockSpec((TH, D_out_p), lambda i, j: (j, 0)),   # W2 h-tile
                pl.BlockSpec((1, D_out_p), lambda i, j: (0, 0)),    # b2
            ],
            out_specs=pl.BlockSpec((TB, D_out_p), lambda i, j: (i, 0)),
            scratch_shapes=[pltpu.VMEM((TB, D_out_p), jnp.float32)],
            compiler_params=pltpu.CompilerParams(
                dimension_semantics=("parallel", "arbitrary"),
                vmem_limit_bytes=vmem_limit),
        )(x_in, w1_p, b1_p, w2_p, b2_p)
    else:
        def call_resident(single_buffer_weights):
            def resident_spec(shape):
                kwargs = {}
                if single_buffer_weights:
                    # Constant index_map -> double-buffering buys nothing;
                    # halves resident-weight VMEM (matters on v7x's 64 MiB).
                    kwargs["pipeline_mode"] = pl.Buffered(1)
                return pl.BlockSpec(shape, lambda i: (0, 0), **kwargs)

            return pl.pallas_call(
                mlp_kernel_resident,
                out_shape=out_shape,
                grid=(grid_b,),
                in_specs=[
                    pl.BlockSpec((TB, D_in_p), lambda i: (i, 0)),   # x: batch-tiled
                    resident_spec((D_in_p, H_p)),                   # W1
                    resident_spec((1, H_p)),                        # b1
                    resident_spec((H_p, D_out_p)),                  # W2
                    resident_spec((1, D_out_p)),                    # b2
                ],
                out_specs=pl.BlockSpec((TB, D_out_p), lambda i: (i, 0)),
                compiler_params=pltpu.CompilerParams(
                    dimension_semantics=("parallel",),
                    vmem_limit_bytes=vmem_limit),
            )(x_in, w1_p, b1_p, w2_p, b2_p)

        try:
            out_p = call_resident(True)
        except Exception:
            # Fallback if this JAX build rejects single-buffered pipeline_mode.
            out_p = call_resident(False)

    return out_p[:B, :D_out]


# --------------------------------------------------------------------------- #
# Matched-precision reference (bf16 MXU operands, f32 accumulate/elementwise)
# --------------------------------------------------------------------------- #
def mlp_reference(x, w1, b1, w2, b2, mxu_dtype=jnp.bfloat16):
    h = jnp.dot(x.astype(mxu_dtype), w1.astype(mxu_dtype),
                preferred_element_type=jnp.float32) + b1.reshape(1, -1)
    h = jnp.maximum(h, LEAKY_SLOPE * h)
    out = jnp.dot(h.astype(mxu_dtype), w2.astype(mxu_dtype),
                  preferred_element_type=jnp.float32) + b2.reshape(1, -1)
    return out


if __name__ == "__main__":
    def run_case(batch, input_dim, hid_dim, output_dim, seed, **kw):
        key = jax.random.PRNGKey(seed)
        kx, kw1, kb1, kw2, kb2 = jax.random.split(key, 5)
        x = jax.random.normal(kx, (batch, input_dim), dtype=jnp.float32)
        # PyTorch stores Linear weight as [out, in]; pre-transposed to [in, out].
        w1 = jax.random.normal(kw1, (input_dim, hid_dim), dtype=jnp.float32) * 0.1
        b1 = jax.random.normal(kb1, (hid_dim,), dtype=jnp.float32) * 0.1
        w2 = jax.random.normal(kw2, (hid_dim, output_dim), dtype=jnp.float32) * 0.1
        b2 = jax.random.normal(kb2, (output_dim,), dtype=jnp.float32) * 0.1

        params = prepare_mlp_params(w1, b1, w2, b2)   # hoisted, one-time prep
        out = jax.block_until_ready(mlp_pallas(x, params, **kw))
        ref = mlp_reference(x, w1, b1, w2, b2)
        assert out.shape == (batch, output_dim)
        assert jnp.allclose(out, ref, atol=2e-2, rtol=2e-2), "mismatch vs reference"
        return out

    # 1) Spec-sized case (small dims; resident-weight path, padded x).
    run_case(8, 32, 64, 16, seed=0)
    # 2) Fully aligned case: no x padding/copy, >=2 parallel batch tiles.
    run_case(64, 128, 256, 128, seed=1)
    # 3) Forced H-tiled accumulator path (3 hidden tiles) — the large-H fallback.
    run_case(64, 32, 300, 16, seed=2, force_h_tiled=True, h_tile=128)

    print("KERNEL_OK")
</pallas_src>

<mosaic_0001>
module attributes {stable_mosaic.version = 11 : i64} {
  func.func @mlp_kernel_resident(%arg0: i32, %arg1: memref<16x128xbf16, #tpu.memory_space<vmem>>, %arg2: memref<128x128xbf16, #tpu.memory_space<vmem>>, %arg3: memref<1x128xf32, #tpu.memory_space<vmem>>, %arg4: memref<128x128xbf16, #tpu.memory_space<vmem>>, %arg5: memref<1x128xf32, #tpu.memory_space<vmem>>, %arg6: memref<16x128xf32, #tpu.memory_space<vmem>>) attributes {dimension_semantics = [#tpu.dimension_semantics<parallel>], iteration_bounds = array<i64: 1>, scalar_prefetch = 0 : i64, scratch_operands = 0 : i64, tpu.core_type = #tpu.core_type<tc>, window_params = [{transform_indices = @transform_0, window_bounds = array<i64: 16, 128>}, {pipeline_mode = #tpu.pipeline_mode<synchronous>, transform_indices = @transform_1, window_bounds = array<i64: 128, 128>}, {pipeline_mode = #tpu.pipeline_mode<synchronous>, transform_indices = @transform_2, window_bounds = array<i64: 1, 128>}, {pipeline_mode = #tpu.pipeline_mode<synchronous>, transform_indices = @transform_3, window_bounds = array<i64: 128, 128>}, {pipeline_mode = #tpu.pipeline_mode<synchronous>, transform_indices = @transform_4, window_bounds = array<i64: 1, 128>}, {transform_indices = @transform_5, window_bounds = array<i64: 16, 128>}]} {
    %c0 = arith.constant 0 : index
    %c0_0 = arith.constant 0 : index
    %0 = vector.load %arg1[%c0, %c0_0] : memref<16x128xbf16, #tpu.memory_space<vmem>>, vector<16x128xbf16>
    %c0_1 = arith.constant 0 : index
    %c0_2 = arith.constant 0 : index
    %1 = vector.load %arg2[%c0_1, %c0_2] : memref<128x128xbf16, #tpu.memory_space<vmem>>, vector<128x128xbf16>
    %cst = arith.constant dense<0.000000e+00> : vector<16x128xf32>
    %2 = tpu.matmul %0, %1, %cst {dimension_numbers = #tpu.dot_dimension_numbers<[1], [0], [0], [1], [0, 0, 1, 1], [], []>} : vector<16x128xbf16>, vector<128x128xbf16>, vector<16x128xf32> -> vector<16x128xf32>
    %c0_3 = arith.constant 0 : index
    %c0_4 = arith.constant 0 : index
    %3 = vector.load %arg3[%c0_3, %c0_4] : memref<1x128xf32, #tpu.memory_space<vmem>>, vector<1x128xf32>
    %4 = vector.broadcast %3 : vector<1x128xf32> to vector<16x128xf32>
    %5 = arith.addf %2, %4 : vector<16x128xf32>
    %cst_5 = arith.constant 0.00999999977 : f32
    %6 = vector.broadcast %cst_5 : f32 to vector<16x128xf32>
    %7 = arith.mulf %6, %5 : vector<16x128xf32>
    %8 = arith.maximumf %5, %7 : vector<16x128xf32>
    %9 = arith.truncf %8 : vector<16x128xf32> to vector<16x128xbf16>
    %c0_6 = arith.constant 0 : index
    %c0_7 = arith.constant 0 : index
    %10 = vector.load %arg4[%c0_6, %c0_7] : memref<128x128xbf16, #tpu.memory_space<vmem>>, vector<128x128xbf16>
    %cst_8 = arith.constant dense<0.000000e+00> : vector<16x128xf32>
    %11 = tpu.matmul %9, %10, %cst_8 {dimension_numbers = #tpu.dot_dimension_numbers<[1], [0], [0], [1], [0, 0, 1, 1], [], []>} : vector<16x128xbf16>, vector<128x128xbf16>, vector<16x128xf32> -> vector<16x128xf32>
    %c0_9 = arith.constant 0 : index
    %c0_10 = arith.constant 0 : index
    %12 = vector.load %arg5[%c0_9, %c0_10] : memref<1x128xf32, #tpu.memory_space<vmem>>, vector<1x128xf32>
    %13 = vector.broadcast %12 : vector<1x128xf32> to vector<16x128xf32>
    %14 = arith.addf %11, %13 : vector<16x128xf32>
    %c0_11 = arith.constant 0 : index
    %c0_12 = arith.constant 0 : index
    %15 = vector.load %arg6[%c0_11, %c0_12] : memref<16x128xf32, #tpu.memory_space<vmem>>, vector<16x128xf32>
    tpu.vector_store %arg6[%c0_11, %c0_12], %14 {strides = array<i32>} : memref<16x128xf32, #tpu.memory_space<vmem>>, vector<16x128xf32>,
    return
  }
  func.func @transform_0(%arg0: i32) -> (i32, i32) {
    %c0_i32 = arith.constant 0 : i32
    %c0_i32_0 = arith.constant 0 : i32
    return %arg0, %c0_i32 : i32, i32
  }
  func.func @transform_1(%arg0: i32) -> (i32, i32) {
    %c0_i32 = arith.constant 0 : i32
    %c0_i32_0 = arith.constant 0 : i32
    %c0_i32_1 = arith.constant 0 : i32
    return %c0_i32, %c0_i32_0 : i32, i32
  }
  func.func @transform_2(%arg0: i32) -> (i32, i32) {
    %c0_i32 = arith.constant 0 : i32
    %c0_i32_0 = arith.constant 0 : i32
    %c0_i32_1 = arith.constant 0 : i32
    return %c0_i32, %c0_i32_0 : i32, i32
  }
  func.func @transform_3(%arg0: i32) -> (i32, i32) {
    %c0_i32 = arith.constant 0 : i32
    %c0_i32_0 = arith.constant 0 : i32
    %c0_i32_1 = arith.constant 0 : i32
    return %c0_i32, %c0_i32_0 : i32, i32
  }
  func.func @transform_4(%arg0: i32) -> (i32, i32) {
    %c0_i32 = arith.constant 0 : i32
    %c0_i32_0 = arith.constant 0 : i32
    %c0_i32_1 = arith.constant 0 : i32
    return %c0_i32, %c0_i32_0 : i32, i32
  }
  func.func @transform_5(%arg0: i32) -> (i32, i32) {
    %c0_i32 = arith.constant 0 : i32
    %c0_i32_0 = arith.constant 0 : i32
    return %arg0, %c0_i32 : i32, i32
  }
}

module attributes {stable_mosaic.version = 11 : i64} {
  func.func @mlp_kernel_resident(%arg0: i32, %arg1: memref<16x128xbf16, #tpu.memory_space<vmem>>, %arg2: memref<128x128xbf16, #tpu.memory_space<vmem>>, %arg3: memref<1x128xf32, #tpu.memory_space<vmem>>, %arg4: memref<128x128xbf16, #tpu.memory_space<vmem>>, %arg5: memref<1x128xf32, #tpu.memory_space<vmem>>, %arg6: memref<16x128xf32, #tpu.memory_space<vmem>>) attributes {dimension_semantics = [#tpu.dimension_semantics<parallel>], iteration_bounds = array<i64: 1>, scalar_prefetch = 0 : i64, scratch_operands = 0 : i64, tpu.core_type = #tpu.core_type<tc>, window_params = [{transform_indices = @transform_0, window_bounds = array<i64: 16, 128>}, {pipeline_mode = #tpu.pipeline_mode<synchronous>, transform_indices = @transform_1, window_bounds = array<i64: 128, 128>}, {pipeline_mode = #tpu.pipeline_mode<synchronous>, transform_indices = @transform_2, window_bounds = array<i64: 1, 128>}, {pipeline_mode = #tpu.pipeline_mode<synchronous>, transform_indices = @transform_3, window_bounds = array<i64: 128, 128>}, {pipeline_mode = #tpu.pipeline_mode<synchronous>, transform_indices = @transform_4, window_bounds = array<i64: 1, 128>}, {transform_indices = @transform_5, window_bounds = array<i64: 16, 128>}]} {
    %c0 = arith.constant 0 : index
    %c0_0 = arith.constant 0 : index
    %0 = vector.load %arg1[%c0, %c0_0] : memref<16x128xbf16, #tpu.memory_space<vmem>>, vector<16x128xbf16>
    %c0_1 = arith.constant 0 : index
    %c0_2 = arith.constant 0 : index
    %1 = vector.load %arg2[%c0_1, %c0_2] : memref<128x128xbf16, #tpu.memory_space<vmem>>, vector<128x128xbf16>
    %cst = arith.constant dense<0.000000e+00> : vector<16x128xf32>
    %2 = tpu.matmul %0, %1, %cst {dimension_numbers = #tpu.dot_dimension_numbers<[1], [0], [0], [1], [0, 0, 1, 1], [], []>} : vector<16x128xbf16>, vector<128x128xbf16>, vector<16x128xf32> -> vector<16x128xf32>
    %c0_3 = arith.constant 0 : index
    %c0_4 = arith.constant 0 : index
    %3 = vector.load %arg3[%c0_3, %c0_4] : memref<1x128xf32, #tpu.memory_space<vmem>>, vector<1x128xf32>
    %4 = vector.broadcast %3 : vector<1x128xf32> to vector<16x128xf32>
    %5 = arith.addf %2, %4 : vector<16x128xf32>
    %cst_5 = arith.constant 0.00999999977 : f32
    %6 = vector.broadcast %cst_5 : f32 to vector<16x128xf32>
    %7 = arith.mulf %6, %5 : vector<16x128xf32>
    %8 = arith.maximumf %5, %7 : vector<16x128xf32>
    %9 = arith.truncf %8 : vector<16x128xf32> to vector<16x128xbf16>
    %c0_6 = arith.constant 0 : index
    %c0_7 = arith.constant 0 : index
    %10 = vector.load %arg4[%c0_6, %c0_7] : memref<128x128xbf16, #tpu.memory_space<vmem>>, vector<128x128xbf16>
    %cst_8 = arith.constant dense<0.000000e+00> : vector<16x128xf32>
    %11 = tpu.matmul %9, %10, %cst_8 {dimension_numbers = #tpu.dot_dimension_numbers<[1], [0], [0], [1], [0, 0, 1, 1], [], []>} : vector<16x128xbf16>, vector<128x128xbf16>, vector<16x128xf32> -> vector<16x128xf32>
    %c0_9 = arith.constant 0 : index
    %c0_10 = arith.constant 0 : index
    %12 = vector.load %arg5[%c0_9, %c0_10] : memref<1x128xf32, #tpu.memory_space<vmem>>, vector<1x128xf32>
    %13 = vector.broadcast %12 : vector<1x128xf32> to vector<16x128xf32>
    %14 = arith.addf %11, %13 : vector<16x128xf32>
    %c0_11 = arith.constant 0 : index
    %c0_12 = arith.constant 0 : index
    %15 = vector.load %arg6[%c0_11, %c0_12] : memref<16x128xf32, #tpu.memory_space<vmem>>, vector<16x128xf32>
    tpu.vector_store %arg6[%c0_11, %c0_12], %14 {strides = array<i32>} : memref<16x128xf32, #tpu.memory_space<vmem>>, vector<16x128xf32>,
    return
  }
  func.func @transform_0(%arg0: i32) -> (i32, i32) {
    %c0_i32 = arith.constant 0 : i32
    %c0_i32_0 = arith.constant 0 : i32
    return %arg0, %c0_i32 : i32, i32
  }
  func.func @transform_1(%arg0: i32) -> (i32, i32) {
    %c0_i32 = arith.constant 0 : i32
    %c0_i32_0 = arith.constant 0 : i32
    %c0_i32_1 = arith.constant 0 : i32
    return %c0_i32, %c0_i32_0 : i32, i32
  }
  func.func @transform_2(%arg0: i32) -> (i32, i32) {
    %c0_i32 = arith.constant 0 : i32
    %c0_i32_0 = arith.constant 0 : i32
    %c0_i32_1 = arith.constant 0 : i32
    return %c0_i32, %c0_i32_0 : i32, i32
  }
  func.func @transform_3(%arg0: i32) -> (i32, i32) {
    %c0_i32 = arith.constant 0 : i32
    %c0_i32_0 = arith.constant 0 : i32
    %c0_i32_1 = arith.constant 0 : i32
    return %c0_i32, %c0_i32_0 : i32, i32
  }
  func.func @transform_4(%arg0: i32) -> (i32, i32) {
    %c0_i32 = arith.constant 0 : i32
    %c0_i32_0 = arith.constant 0 : i32
    %c0_i32_1 = arith.constant 0 : i32
    return %c0_i32, %c0_i32_0 : i32, i32
  }
  func.func @transform_5(%arg0: i32) -> (i32, i32) {
    %c0_i32 = arith.constant 0 : i32
    %c0_i32_0 = arith.constant 0 : i32
    return %arg0, %c0_i32 : i32, i32
  }
}

</mosaic_0001>

<llo_original>
// kernel: tpu_custom_call.1
$region0: #{tpu_custom_call.1}
  #allocation0 [shape = 'u32[]', space=smem, size = 0x4, offset = 0x4, fixed_abs, tag = 'smem constant byte address 0x4 - core index']
  #allocation1 [shape = 'u32[144,128]{1,0:T(1,128)}', space=vmem, size = 0x12000, scoped, tag = 'internal scratch']
  %s0 = inlined_call_operand.hbm [shape: bf16[16,128], index: 0, kind: input, shape index: {}]
  %s1 = inlined_call_operand.hbm [shape: bf16[128,128], index: 1, kind: input, shape index: {}]
  %s2 = inlined_call_operand.vmem [shape: f32[1,128], index: 2, kind: input, shape index: {}]
  %s3 = inlined_call_operand.hbm [shape: bf16[128,128], index: 3, kind: input, shape index: {}]
  %s4 = inlined_call_operand.vmem [shape: f32[1,128], index: 4, kind: input, shape index: {}]
  %s5 = inlined_call_operand.hbm [shape: f32[16,128], index: 5, kind: output, shape index: {}]
  %s6 = sld [smem:[#allocation0]]
  $region42: #{tpu_custom_call.1} parent=0
    _
  %s8 = ssub.s32 1, %s6
  %s9 = scalar_select 0, %s8, %s6
  $region1: #{tpu_custom_call.1} parent=0
    #allocation2 [shape = 'u8[4096]{0}', space=vmem, size = 0x1000, scoped, tag = 'input window, operand 0, single buffered']
    #allocation3 [shape = 's32[1]{0}', space=sflag, size = 0x4, scoped, tag = 'scoped memory for tpu_custom_call.1']
    #allocation4 [shape = 's32[1]{0}', space=sflag, size = 0x4, scoped, tag = 'scoped memory for tpu_custom_call.1']
    #allocation5 [shape = 'u8[32768]{0}', space=vmem, size = 0x8000, scoped, tag = 'input window, operand 1, single buffered']
    #allocation6 [shape = 's32[1]{0}', space=sflag, size = 0x4, scoped, tag = 'scoped memory for tpu_custom_call.1']
    #allocation7 [shape = 'u8[32768]{0}', space=vmem, size = 0x8000, scoped, tag = 'input window, operand 3, single buffered']
    #allocation8 [shape = 'u8[8192]{0}', space=vmem, size = 0x2000, scoped, tag = 'output window, operand 0, single buffered']
    %10 = vsyncpa [#allocation3], 0
    %11 = vsyncpa [#allocation6], 0
    %12 = vsyncpa [#allocation4], 0
    // Predicated region
    $region2: #{tpu_custom_call.1} parent=1 // pred_check
      _
    $region3: #{tpu_custom_call.1} parent=1 // pred_check_branch
      %14 = sbr.rel (0) target = $region5
    $region4: #{tpu_custom_call.1} parent=1 // pred_region
      %s16 = ssub.s32 128, 128
      %17 = vsyncadd [#allocation3], %s16
      %s18 = sshll.u32 [#allocation2], 4
      %s19 = int_to_ptr.vmem [resolvable:$true] %s18
      %24 = dma.hbm_to_vmem [thread:$0]  %s0, 128, %s19, [#allocation3], 64, 64, 4
    $region5: #{tpu_custom_call.1} parent=1 // pred_fallthru
      _
    // Predicated region
    $region6: #{tpu_custom_call.1} parent=1 // pred_check
      _
    $region7: #{tpu_custom_call.1} parent=1 // pred_check_branch
      %26 = sbr.rel (0) target = $region9
    $region8: #{tpu_custom_call.1} parent=1 // pred_region
      %s28 = ssub.s32 1024, 1024
      %29 = vsyncadd [#allocation6], %s28
      %s30 = sshll.u32 [#allocation5], 4
      %s31 = int_to_ptr.vmem [resolvable:$true] %s30
      %36 = dma.hbm_to_vmem [thread:$0]  %s1, 1024, %s31, [#allocation6], 64, 64, 4
    $region9: #{tpu_custom_call.1} parent=1 // pred_fallthru
      _
    // Predicated region
    $region10: #{tpu_custom_call.1} parent=1 // pred_check
      _
    $region11: #{tpu_custom_call.1} parent=1 // pred_check_branch
      %38 = sbr.rel (0) target = $region13
    $region12: #{tpu_custom_call.1} parent=1 // pred_region
      _
    $region13: #{tpu_custom_call.1} parent=1 // pred_fallthru
      _
    // Predicated region
    $region14: #{tpu_custom_call.1} parent=1 // pred_check
      _
    $region15: #{tpu_custom_call.1} parent=1 // pred_check_branch
      %40 = sbr.rel (0) target = $region17
    $region16: #{tpu_custom_call.1} parent=1 // pred_region
      %s42 = ssub.s32 1024, 1024
      %43 = vsyncadd [#allocation6], %s42
      %s44 = sshll.u32 [#allocation7], 4
      %s45 = int_to_ptr.vmem [resolvable:$true] %s44
      %50 = dma.hbm_to_vmem [thread:$0]  %s3, 1024, %s45, [#allocation6], 64, 64, 4
    $region17: #{tpu_custom_call.1} parent=1 // pred_fallthru
      _
    // Predicated region
    $region18: #{tpu_custom_call.1} parent=1 // pred_check
      _
    $region19: #{tpu_custom_call.1} parent=1 // pred_check_branch
      %52 = sbr.rel (0) target = $region21
    $region20: #{tpu_custom_call.1} parent=1 // pred_region
      _
    $region21: #{tpu_custom_call.1} parent=1 // pred_fallthru
      _
    // Predicated region
    $region22: #{tpu_custom_call.1} parent=1 // pred_check
      _
    $region23: #{tpu_custom_call.1} parent=1 // pred_check_branch
      %54 = sbr.rel (0) target = $region25
    $region24: #{tpu_custom_call.1} parent=1 // pred_region
      %55 = dma.done [#allocation3], 128
    $region25: #{tpu_custom_call.1} parent=1 // pred_fallthru
      _
    // Predicated region
    $region26: #{tpu_custom_call.1} parent=1 // pred_check
      _
    $region27: #{tpu_custom_call.1} parent=1 // pred_check_branch
      %57 = sbr.rel (0) target = $region29
    $region28: #{tpu_custom_call.1} parent=1 // pred_region
      %58 = dma.done [#allocation6], 1024
    $region29: #{tpu_custom_call.1} parent=1 // pred_fallthru
      _
    // Predicated region
    $region30: #{tpu_custom_call.1} parent=1 // pred_check
      _
    $region31: #{tpu_custom_call.1} parent=1 // pred_check_branch
      %60 = sbr.rel (0) target = $region33
    $region32: #{tpu_custom_call.1} parent=1 // pred_region
      %61 = dma.done [#allocation6], 1024
    $region33: #{tpu_custom_call.1} parent=1 // pred_fallthru
      _
    %v63 = vld [vmem:[#allocation2] sm:$0xf]
    %v64 = vld [vmem:[#allocation2 + $0x4] sm:$0xf]
    %v65 = vld [vmem:[#allocation5] sm:$0xf]
    %v66 = vld [vmem:[#allocation5 + $0x4] sm:$0xf]
    %v67 = vld [vmem:[#allocation5 + $0x8] sm:$0xf]
    %v68 = vld [vmem:[#allocation5 + $0xc] sm:$0xf]
    %v69 = vld [vmem:[#allocation5 + $0x10] sm:$0xf]
    %v70 = vld [vmem:[#allocation5 + $0x14] sm:$0xf]
    %v71 = vld [vmem:[#allocation5 + $0x18] sm:$0xf]
    %v72 = vld [vmem:[#allocation5 + $0x1c] sm:$0xf]
    %v73 = vld [vmem:[#allocation5 + $0x20] sm:$0xf]
    %v74 = vld [vmem:[#allocation5 + $0x24] sm:$0xf]
    %v75 = vld [vmem:[#allocation5 + $0x28] sm:$0xf]
    %v76 = vld [vmem:[#allocation5 + $0x2c] sm:$0xf]
    %v77 = vld [vmem:[#allocation5 + $0x30] sm:$0xf]
    %v78 = vld [vmem:[#allocation5 + $0x34] sm:$0xf]
    %v79 = vld [vmem:[#allocation5 + $0x38] sm:$0xf]
    %v80 = vld [vmem:[#allocation5 + $0x3c] sm:$0xf]
    %v81 = vld [vmem:[%s2] sm:$0x1]
    %v83 = vlaneseq
    %v84 = vshrl.u32 %v83, 7
    %v85 = vsub.s32 0, %v84
    %v86 = vrot.slane %v81, %v85
    %v90 = vunpack.c.l.b16 %v63
    %v91 = vunpack.c.l.b16 %v64
    %v92 = vpack.c.b16 %v91, %v90
    %v110 = vunpack.c.l.b16 %v65
    %v111 = vunpack.c.l.b16 %v66
    %v112 = vunpack.c.l.b16 %v67
    %v113 = vunpack.c.l.b16 %v68
    %v114 = vunpack.c.l.b16 %v69
    %v115 = vunpack.c.l.b16 %v70
    %v116 = vunpack.c.l.b16 %v71
    %v117 = vunpack.c.l.b16 %v72
    %v118 = vunpack.c.l.b16 %v73
    %v119 = vunpack.c.l.b16 %v74
    %v120 = vunpack.c.l.b16 %v75
    %v121 = vunpack.c.l.b16 %v76
    %v122 = vunpack.c.l.b16 %v77
    %v123 = vunpack.c.l.b16 %v78
    %v124 = vunpack.c.l.b16 %v79
    %v125 = vunpack.c.l.b16 %v80
    %v126 = vpack.c.b16 %v111, %v110
    %v127 = vpack.c.b16 %v113, %v112
    %v128 = vpack.c.b16 %v115, %v114
    %v129 = vpack.c.b16 %v117, %v116
    %v130 = vpack.c.b16 %v119, %v118
    %v131 = vpack.c.b16 %v121, %v120
    %v132 = vpack.c.b16 %v123, %v122
    %v133 = vpack.c.b16 %v125, %v124
    %142 = vmatprep.subr.bf16.mxu0 0
    %143 = vmatpush1.bf16.msra.mxu0 %v126
    %144 = vmatprep.subr.bf16.mxu0 0
    %145 = vmatpush1.bf16.msra.mxu0 %v127
    %146 = vmatprep.subr.bf16.mxu0 0
    %147 = vmatpush1.bf16.msra.mxu0 %v128
    %148 = vmatprep.subr.bf16.mxu0 0
    %149 = vmatpush1.bf16.msra.mxu0 %v129
    %150 = vmatprep.subr.bf16.mxu0 0
    %151 = vmatpush1.bf16.msra.mxu0 %v130
    %152 = vmatprep.subr.bf16.mxu0 0
    %153 = vmatpush1.bf16.msra.mxu0 %v131
    %154 = vmatprep.subr.bf16.mxu0 0
    %155 = vmatpush1.bf16.msra.mxu0 %v132
    %156 = vmatprep.subr.bf16.mxu0 0
    %157 = vmatpush1.bf16.msra.mxu0 %v133
    %158 = vmatprep.subr.bf16.mxu0 0
    %159 = vmatpush1.bf16.msra.mxu0 0
    %160 = vmatprep.subr.bf16.mxu0 0
    %161 = vmatpush1.bf16.msra.mxu0 0
    %162 = vmatprep.subr.bf16.mxu0 0
    %163 = vmatpush1.bf16.msra.mxu0 0
    %164 = vmatprep.subr.bf16.mxu0 0
    %165 = vmatpush1.bf16.msra.mxu0 0
    %166 = vmatprep.subr.bf16.mxu0 0
    %167 = vmatpush1.bf16.msra.mxu0 0
    %168 = vmatprep.subr.bf16.mxu0 0
    %169 = vmatpush1.bf16.msra.mxu0 0
    %170 = vmatprep.subr.bf16.mxu0 0
    %171 = vmatpush1.bf16.msra.mxu0 0
    %172 = vmatprep.subr.bf16.mxu0 0
    %173 = vmatpush1.bf16.msra.mxu0 0
    %174 = vmatprep.mubr.bf16.mxu0 0
    %175 = vmatmul.mubr.bf16.gmra.mrb[0].mxu0 %v92
    %v176 = vpop.f32.mrb[0].mxu0
    %v177 = vadd.f32 %v86, %v176
    %v178 = vpop.f32.mrb[0].mxu0
    %v179 = vpop.f32.mrb[0].mxu0
    %v180 = vadd.f32 %v86, %v179
    %v181 = vpop.f32.mrb[0].mxu0
    %182 = vdwg.mxu0
    %v183 = vmul.f32 %v177, 0.01
    %v184 = vmul.f32 %v180, 0.01
    %v185 = vmax.f32 %v177, %v183
    %v186 = vmax.f32 %v180, %v184
    %v187 = vpack.c.bf16 %v186, %v185
    %v188 = vld [vmem:[#allocation7] sm:$0xf]
    %v189 = vld [vmem:[#allocation7 + $0x4] sm:$0xf]
    %v190 = vld [vmem:[#allocation7 + $0x8] sm:$0xf]
    %v191 = vld [vmem:[#allocation7 + $0xc] sm:$0xf]
    %v192 = vld [vmem:[#allocation7 + $0x10] sm:$0xf]
    %v193 = vld [vmem:[#allocation7 + $0x14] sm:$0xf]
    %v194 = vld [vmem:[#allocation7 + $0x18] sm:$0xf]
    %v195 = vld [vmem:[#allocation7 + $0x1c] sm:$0xf]
    %v196 = vld [vmem:[#allocation7 + $0x20] sm:$0xf]
    %v197 = vld [vmem:[#allocation7 + $0x24] sm:$0xf]
    %v198 = vld [vmem:[#allocation7 + $0x28] sm:$0xf]
    %v199 = vld [vmem:[#allocation7 + $0x2c] sm:$0xf]
    %v200 = vld [vmem:[#allocation7 + $0x30] sm:$0xf]
    %v201 = vld [vmem:[#allocation7 + $0x34] sm:$0xf]
    %v202 = vld [vmem:[#allocation7 + $0x38] sm:$0xf]
    %v203 = vld [vmem:[#allocation7 + $0x3c] sm:$0xf]
    %v204 = vld [vmem:[%s4] sm:$0x1]
    %v206 = vlaneseq
    %v207 = vshrl.u32 %v206, 7
    %v208 = vsub.s32 0, %v207
    %v209 = vrot.slane %v204, %v208
    %v227 = vunpack.c.l.b16 %v188
    %v228 = vunpack.c.l.b16 %v189
    %v229 = vunpack.c.l.b16 %v190
    %v230 = vunpack.c.l.b16 %v191
    %v231 = vunpack.c.l.b16 %v192
    %v232 = vunpack.c.l.b16 %v193
    %v233 = vunpack.c.l.b16 %v194
    %v234 = vunpack.c.l.b16 %v195
    %v235 = vunpack.c.l.b16 %v196
    %v236 = vunpack.c.l.b16 %v197
    %v237 = vunpack.c.l.b16 %v198
    %v238 = vunpack.c.l.b16 %v199
    %v239 = vunpack.c.l.b16 %v200
    %v240 = vunpack.c.l.b16 %v201
    %v241 = vunpack.c.l.b16 %v202
    %v242 = vunpack.c.l.b16 %v203
    %v243 = vpack.c.b16 %v228, %v227
    %v244 = vpack.c.b16 %v230, %v229
    %v245 = vpack.c.b16 %v232, %v231
    %v246 = vpack.c.b16 %v234, %v233
    %v247 = vpack.c.b16 %v236, %v235
    %v248 = vpack.c.b16 %v238, %v237
    %v249 = vpack.c.b16 %v240, %v239
    %v250 = vpack.c.b16 %v242, %v241
    %259 = vmatprep.subr.bf16.mxu0 0
    %260 = vmatpush1.bf16.msra.mxu0 %v243
    %261 = vmatprep.subr.bf16.mxu0 0
    %262 = vmatpush1.bf16.msra.mxu0 %v244
    %263 = vmatprep.subr.bf16.mxu0 0
    %264 = vmatpush1.bf16.msra.mxu0 %v245
    %265 = vmatprep.subr.bf16.mxu0 0
    %266 = vmatpush1.bf16.msra.mxu0 %v246
    %267 = vmatprep.subr.bf16.mxu0 0
    %268 = vmatpush1.bf16.msra.mxu0 %v247
    %269 = vmatprep.subr.bf16.mxu0 0
    %270 = vmatpush1.bf16.msra.mxu0 %v248
    %271 = vmatprep.subr.bf16.mxu0 0
    %272 = vmatpush1.bf16.msra.mxu0 %v249
    %273 = vmatprep.subr.bf16.mxu0 0
    %274 = vmatpush1.bf16.msra.mxu0 %v250
    %275 = vmatprep.subr.bf16.mxu0 0
    %276 = vmatpush1.bf16.msra.mxu0 0
    %277 = vmatprep.subr.bf16.mxu0 0
    %278 = vmatpush1.bf16.msra.mxu0 0
    %279 = vmatprep.subr.bf16.mxu0 0
    %280 = vmatpush1.bf16.msra.mxu0 0
    %281 = vmatprep.subr.bf16.mxu0 0
    %282 = vmatpush1.bf16.msra.mxu0 0
    %283 = vmatprep.subr.bf16.mxu0 0
    %284 = vmatpush1.bf16.msra.mxu0 0
    %285 = vmatprep.subr.bf16.mxu0 0
    %286 = vmatpush1.bf16.msra.mxu0 0
    %287 = vmatprep.subr.bf16.mxu0 0
    %288 = vmatpush1.bf16.msra.mxu0 0
    %289 = vmatprep.subr.bf16.mxu0 0
    %290 = vmatpush1.bf16.msra.mxu0 0
    %291 = vmatprep.mubr.bf16.mxu0 0
    %292 = vmatmul.mubr.bf16.gmra.mrb[0].mxu0 %v187
    %v293 = vpop.f32.mrb[0].mxu0
    %v294 = vadd.f32 %v209, %v293
    %v295 = vpop.f32.mrb[0].mxu0
    %v296 = vpop.f32.mrb[0].mxu0
    %v297 = vadd.f32 %v209, %v296
    %v298 = vpop.f32.mrb[0].mxu0
    %299 = vdwg.mxu0
    %300 = vst [vmem:[#allocation8] sm:$0xff] %v294
    %301 = vst [vmem:[#allocation8 + $0x8] sm:$0xff] %v297
    // Predicated region
    $region34: #{tpu_custom_call.1} parent=1 // pred_check
      _
    $region35: #{tpu_custom_call.1} parent=1 // pred_check_branch
      %303 = sbr.rel (0) target = $region37
    $region36: #{tpu_custom_call.1} parent=1 // pred_region
      %s305 = ssub.s32 256, 256
      %306 = vsyncadd [#allocation4], %s305
      %s307 = sshll.u32 [#allocation8], 4
      %s308 = int_to_ptr.vmem [resolvable:$true] %s307
      %313 = dma.vmem_to_hbm [thread:$0]  %s308, 256, %s5, [#allocation4], 128, 128, 8
    $region37: #{tpu_custom_call.1} parent=1 // pred_fallthru
      _
    // Predicated region
    $region38: #{tpu_custom_call.1} parent=1 // pred_check
      _
    $region39: #{tpu_custom_call.1} parent=1 // pred_check_branch
      %315 = sbr.rel (0) target = $region41
    $region40: #{tpu_custom_call.1} parent=1 // pred_region
      %316 = dma.done [#allocation4], 256
    $region41: #{tpu_custom_call.1} parent=1 // pred_fallthru
      _
    %317 = vsyncpa [#allocation3], 1
    %318 = vsyncpa [#allocation6], 1
    %319 = vsyncpa [#allocation4], 1

// kernel: tpu_custom_call.1
$region0: #{tpu_custom_call.1}
  #allocation0 [shape = 'u32[]', space=smem, size = 0x4, offset = 0x4, fixed_abs, tag = 'smem constant byte address 0x4 - core index']
  #allocation1 [shape = 'u32[144,128]{1,0:T(1,128)}', space=vmem, size = 0x12000, scoped, tag = 'internal scratch']
  %s0 = inlined_call_operand.hbm [shape: bf16[16,128], index: 0, kind: input, shape index: {}]
  %s1 = inlined_call_operand.hbm [shape: bf16[128,128], index: 1, kind: input, shape index: {}]
  %s2 = inlined_call_operand.vmem [shape: f32[1,128], index: 2, kind: input, shape index: {}]
  %s3 = inlined_call_operand.hbm [shape: bf16[128,128], index: 3, kind: input, shape index: {}]
  %s4 = inlined_call_operand.vmem [shape: f32[1,128], index: 4, kind: input, shape index: {}]
  %s5 = inlined_call_operand.hbm [shape: f32[16,128], index: 5, kind: output, shape index: {}]
  %s6 = sld [smem:[#allocation0]]
  $region42: #{tpu_custom_call.1} parent=0
    _
  %s8 = ssub.s32 1, %s6
  %s9 = scalar_select 0, %s8, %s6
  $region1: #{tpu_custom_call.1} parent=0
    #allocation2 [shape = 'u8[4096]{0}', space=vmem, size = 0x1000, scoped, tag = 'input window, operand 0, single buffered']
    #allocation3 [shape = 's32[1]{0}', space=sflag, size = 0x4, scoped, tag = 'scoped memory for tpu_custom_call.1']
    #allocation4 [shape = 's32[1]{0}', space=sflag, size = 0x4, scoped, tag = 'scoped memory for tpu_custom_call.1']
    #allocation5 [shape = 'u8[32768]{0}', space=vmem, size = 0x8000, scoped, tag = 'input window, operand 1, single buffered']
    #allocation6 [shape = 's32[1]{0}', space=sflag, size = 0x4, scoped, tag = 'scoped memory for tpu_custom_call.1']
    #allocation7 [shape = 'u8[32768]{0}', space=vmem, size = 0x8000, scoped, tag = 'input window, operand 3, single buffered']
    #allocation8 [shape = 'u8[8192]{0}', space=vmem, size = 0x2000, scoped, tag = 'output window, operand 0, single buffered']
    %10 = vsyncpa [#allocation3], 0
    %11 = vsyncpa [#allocation6], 0
    %12 = vsyncpa [#allocation4], 0
    // Predicated region
    $region2: #{tpu_custom_call.1} parent=1 // pred_check
      _
    $region3: #{tpu_custom_call.1} parent=1 // pred_check_branch
      %14 = sbr.rel (0) target = $region5
    $region4: #{tpu_custom_call.1} parent=1 // pred_region
      %s16 = ssub.s32 128, 128
      %17 = vsyncadd [#allocation3], %s16
      %s18 = sshll.u32 [#allocation2], 4
      %s19 = int_to_ptr.vmem [resolvable:$true] %s18
      %24 = dma.hbm_to_vmem [thread:$0]  %s0, 128, %s19, [#allocation3], 64, 64, 4
    $region5: #{tpu_custom_call.1} parent=1 // pred_fallthru
      _
    // Predicated region
    $region6: #{tpu_custom_call.1} parent=1 // pred_check
      _
    $region7: #{tpu_custom_call.1} parent=1 // pred_check_branch
      %26 = sbr.rel (0) target = $region9
    $region8: #{tpu_custom_call.1} parent=1 // pred_region
      %s28 = ssub.s32 1024, 1024
      %29 = vsyncadd [#allocation6], %s28
      %s30 = sshll.u32 [#allocation5], 4
      %s31 = int_to_ptr.vmem [resolvable:$true] %s30
      %36 = dma.hbm_to_vmem [thread:$0]  %s1, 1024, %s31, [#allocation6], 64, 64, 4
    $region9: #{tpu_custom_call.1} parent=1 // pred_fallthru
      _
    // Predicated region
    $region10: #{tpu_custom_call.1} parent=1 // pred_check
      _
    $region11: #{tpu_custom_call.1} parent=1 // pred_check_branch
      %38 = sbr.rel (0) target = $region13
    $region12: #{tpu_custom_call.1} parent=1 // pred_region
      _
    $region13: #{tpu_custom_call.1} parent=1 // pred_fallthru
      _
    // Predicated region
    $region14: #{tpu_custom_call.1} parent=1 // pred_check
      _
    $region15: #{tpu_custom_call.1} parent=1 // pred_check_branch
      %40 = sbr.rel (0) target = $region17
    $region16: #{tpu_custom_call.1} parent=1 // pred_region
      %s42 = ssub.s32 1024, 1024
      %43 = vsyncadd [#allocation6], %s42
      %s44 = sshll.u32 [#allocation7], 4
      %s45 = int_to_ptr.vmem [resolvable:$true] %s44
      %50 = dma.hbm_to_vmem [thread:$0]  %s3, 1024, %s45, [#allocation6], 64, 64, 4
    $region17: #{tpu_custom_call.1} parent=1 // pred_fallthru
      _
    // Predicated region
    $region18: #{tpu_custom_call.1} parent=1 // pred_check
      _
    $region19: #{tpu_custom_call.1} parent=1 // pred_check_branch
      %52 = sbr.rel (0) target = $region21
    $region20: #{tpu_custom_call.1} parent=1 // pred_region
      _
    $region21: #{tpu_custom_call.1} parent=1 // pred_fallthru
      _
    // Predicated region
    $region22: #{tpu_custom_call.1} parent=1 // pred_check
      _
    $region23: #{tpu_custom_call.1} parent=1 // pred_check_branch
      %54 = sbr.rel (0) target = $region25
    $region24: #{tpu_custom_call.1} parent=1 // pred_region
      %55 = dma.done [#allocation3], 128
    $region25: #{tpu_custom_call.1} parent=1 // pred_fallthru
      _
    // Predicated region
    $region26: #{tpu_custom_call.1} parent=1 // pred_check
      _
    $region27: #{tpu_custom_call.1} parent=1 // pred_check_branch
      %57 = sbr.rel (0) target = $region29
    $region28: #{tpu_custom_call.1} parent=1 // pred_region
      %58 = dma.done [#allocation6], 1024
    $region29: #{tpu_custom_call.1} parent=1 // pred_fallthru
      _
    // Predicated region
    $region30: #{tpu_custom_call.1} parent=1 // pred_check
      _
    $region31: #{tpu_custom_call.1} parent=1 // pred_check_branch
      %60 = sbr.rel (0) target = $region33
    $region32: #{tpu_custom_call.1} parent=1 // pred_region
      %61 = dma.done [#allocation6], 1024
    $region33: #{tpu_custom_call.1} parent=1 // pred_fallthru
      _
    %v63 = vld [vmem:[#allocation2] sm:$0xf]
    %v64 = vld [vmem:[#allocation2 + $0x4] sm:$0xf]
    %v65 = vld [vmem:[#allocation5] sm:$0xf]
    %v66 = vld [vmem:[#allocation5 + $0x4] sm:$0xf]
    %v67 = vld [vmem:[#allocation5 + $0x8] sm:$0xf]
    %v68 = vld [vmem:[#allocation5 + $0xc] sm:$0xf]
    %v69 = vld [vmem:[#allocation5 + $0x10] sm:$0xf]
    %v70 = vld [vmem:[#allocation5 + $0x14] sm:$0xf]
    %v71 = vld [vmem:[#allocation5 + $0x18] sm:$0xf]
    %v72 = vld [vmem:[#allocation5 + $0x1c] sm:$0xf]
    %v73 = vld [vmem:[#allocation5 + $0x20] sm:$0xf]
    %v74 = vld [vmem:[#allocation5 + $0x24] sm:$0xf]
    %v75 = vld [vmem:[#allocation5 + $0x28] sm:$0xf]
    %v76 = vld [vmem:[#allocation5 + $0x2c] sm:$0xf]
    %v77 = vld [vmem:[#allocation5 + $0x30] sm:$0xf]
    %v78 = vld [vmem:[#allocation5 + $0x34] sm:$0xf]
    %v79 = vld [vmem:[#allocation5 + $0x38] sm:$0xf]
    %v80 = vld [vmem:[#allocation5 + $0x3c] sm:$0xf]
    %v81 = vld [vmem:[%s2] sm:$0x1]
    %v83 = vlaneseq
    %v84 = vshrl.u32 %v83, 7
    %v85 = vsub.s32 0, %v84
    %v86 = vrot.slane %v81, %v85
    %v90 = vunpack.c.l.b16 %v63
    %v91 = vunpack.c.l.b16 %v64
    %v92 = vpack.c.b16 %v91, %v90
    %v110 = vunpack.c.l.b16 %v65
    %v111 = vunpack.c.l.b16 %v66
    %v112 = vunpack.c.l.b16 %v67
    %v113 = vunpack.c.l.b16 %v68
    %v114 = vunpack.c.l.b16 %v69
    %v115 = vunpack.c.l.b16 %v70
    %v116 = vunpack.c.l.b16 %v71
    %v117 = vunpack.c.l.b16 %v72
    %v118 = vunpack.c.l.b16 %v73
    %v119 = vunpack.c.l.b16 %v74
    %v120 = vunpack.c.l.b16 %v75
    %v121 = vunpack.c.l.b16 %v76
    %v122 = vunpack.c.l.b16 %v77
    %v123 = vunpack.c.l.b16 %v78
    %v124 = vunpack.c.l.b16 %v79
    %v125 = vunpack.c.l.b16 %v80
    %v126 = vpack.c.b16 %v111, %v110
    %v127 = vpack.c.b16 %v113, %v112
    %v128 = vpack.c.b16 %v115, %v114
    %v129 = vpack.c.b16 %v117, %v116
    %v130 = vpack.c.b16 %v119, %v118
    %v131 = vpack.c.b16 %v121, %v120
    %v132 = vpack.c.b16 %v123, %v122
    %v133 = vpack.c.b16 %v125, %v124
    %142 = vmatprep.subr.bf16.mxu0 0
    %143 = vmatpush1.bf16.msra.mxu0 %v126
    %144 = vmatprep.subr.bf16.mxu0 0
    %145 = vmatpush1.bf16.msra.mxu0 %v127
    %146 = vmatprep.subr.bf16.mxu0 0
    %147 = vmatpush1.bf16.msra.mxu0 %v128
    %148 = vmatprep.subr.bf16.mxu0 0
    %149 = vmatpush1.bf16.msra.mxu0 %v129
    %150 = vmatprep.subr.bf16.mxu0 0
    %151 = vmatpush1.bf16.msra.mxu0 %v130
    %152 = vmatprep.subr.bf16.mxu0 0
    %153 = vmatpush1.bf16.msra.mxu0 %v131
    %154 = vmatprep.subr.bf16.mxu0 0
    %155 = vmatpush1.bf16.msra.mxu0 %v132
    %156 = vmatprep.subr.bf16.mxu0 0
    %157 = vmatpush1.bf16.msra.mxu0 %v133
    %158 = vmatprep.subr.bf16.mxu0 0
    %159 = vmatpush1.bf16.msra.mxu0 0
    %160 = vmatprep.subr.bf16.mxu0 0
    %161 = vmatpush1.bf16.msra.mxu0 0
    %162 = vmatprep.subr.bf16.mxu0 0
    %163 = vmatpush1.bf16.msra.mxu0 0
    %164 = vmatprep.subr.bf16.mxu0 0
    %165 = vmatpush1.bf16.msra.mxu0 0
    %166 = vmatprep.subr.bf16.mxu0 0
    %167 = vmatpush1.bf16.msra.mxu0 0
    %168 = vmatprep.subr.bf16.mxu0 0
    %169 = vmatpush1.bf16.msra.mxu0 0
    %170 = vmatprep.subr.bf16.mxu0 0
    %171 = vmatpush1.bf16.msra.mxu0 0
    %172 = vmatprep.subr.bf16.mxu0 0
    %173 = vmatpush1.bf16.msra.mxu0 0
    %174 = vmatprep.mubr.bf16.mxu0 0
    %175 = vmatmul.mubr.bf16.gmra.mrb[0].mxu0 %v92
    %v176 = vpop.f32.mrb[0].mxu0
    %v177 = vadd.f32 %v86, %v176
    %v178 = vpop.f32.mrb[0].mxu0
    %v179 = vpop.f32.mrb[0].mxu0
    %v180 = vadd.f32 %v86, %v179
    %v181 = vpop.f32.mrb[0].mxu0
    %182 = vdwg.mxu0
    %v183 = vmul.f32 %v177, 0.01
    %v184 = vmul.f32 %v180, 0.01
    %v185 = vmax.f32 %v177, %v183
    %v186 = vmax.f32 %v180, %v184
    %v187 = vpack.c.bf16 %v186, %v185
    %v188 = vld [vmem:[#allocation7] sm:$0xf]
    %v189 = vld [vmem:[#allocation7 + $0x4] sm:$0xf]
    %v190 = vld [vmem:[#allocation7 + $0x8] sm:$0xf]
    %v191 = vld [vmem:[#allocation7 + $0xc] sm:$0xf]
    %v192 = vld [vmem:[#allocation7 + $0x10] sm:$0xf]
    %v193 = vld [vmem:[#allocation7 + $0x14] sm:$0xf]
    %v194 = vld [vmem:[#allocation7 + $0x18] sm:$0xf]
    %v195 = vld [vmem:[#allocation7 + $0x1c] sm:$0xf]
    %v196 = vld [vmem:[#allocation7 + $0x20] sm:$0xf]
    %v197 = vld [vmem:[#allocation7 + $0x24] sm:$0xf]
    %v198 = vld [vmem:[#allocation7 + $0x28] sm:$0xf]
    %v199 = vld [vmem:[#allocation7 + $0x2c] sm:$0xf]
    %v200 = vld [vmem:[#allocation7 + $0x30] sm:$0xf]
    %v201 = vld [vmem:[#allocation7 + $0x34] sm:$0xf]
    %v202 = vld [vmem:[#allocation7 + $0x38] sm:$0xf]
    %v203 = vld [vmem:[#allocation7 + $0x3c] sm:$0xf]
    %v204 = vld [vmem:[%s4] sm:$0x1]
    %v206 = vlaneseq
    %v207 = vshrl.u32 %v206, 7
    %v208 = vsub.s32 0, %v207
    %v209 = vrot.slane %v204, %v208
    %v227 = vunpack.c.l.b16 %v188
    %v228 = vunpack.c.l.b16 %v189
    %v229 = vunpack.c.l.b16 %v190
    %v230 = vunpack.c.l.b16 %v191
    %v231 = vunpack.c.l.b16 %v192
    %v232 = vunpack.c.l.b16 %v193
    %v233 = vunpack.c.l.b16 %v194
    %v234 = vunpack.c.l.b16 %v195
    %v235 = vunpack.c.l.b16 %v196
    %v236 = vunpack.c.l.b16 %v197
    %v237 = vunpack.c.l.b16 %v198
    %v238 = vunpack.c.l.b16 %v199
    %v239 = vunpack.c.l.b16 %v200
    %v240 = vunpack.c.l.b16 %v201
    %v241 = vunpack.c.l.b16 %v202
    %v242 = vunpack.c.l.b16 %v203
    %v243 = vpack.c.b16 %v228, %v227
    %v244 = vpack.c.b16 %v230, %v229
    %v245 = vpack.c.b16 %v232, %v231
    %v246 = vpack.c.b16 %v234, %v233
    %v247 = vpack.c.b16 %v236, %v235
    %v248 = vpack.c.b16 %v238, %v237
    %v249 = vpack.c.b16 %v240, %v239
    %v250 = vpack.c.b16 %v242, %v241
    %259 = vmatprep.subr.bf16.mxu0 0
    %260 = vmatpush1.bf16.msra.mxu0 %v243
    %261 = vmatprep.subr.bf16.mxu0 0
    %262 = vmatpush1.bf16.msra.mxu0 %v244
    %263 = vmatprep.subr.bf16.mxu0 0
    %264 = vmatpush1.bf16.msra.mxu0 %v245
    %265 = vmatprep.subr.bf16.mxu0 0
    %266 = vmatpush1.bf16.msra.mxu0 %v246
    %267 = vmatprep.subr.bf16.mxu0 0
    %268 = vmatpush1.bf16.msra.mxu0 %v247
    %269 = vmatprep.subr.bf16.mxu0 0
    %270 = vmatpush1.bf16.msra.mxu0 %v248
    %271 = vmatprep.subr.bf16.mxu0 0
    %272 = vmatpush1.bf16.msra.mxu0 %v249
    %273 = vmatprep.subr.bf16.mxu0 0
    %274 = vmatpush1.bf16.msra.mxu0 %v250
    %275 = vmatprep.subr.bf16.mxu0 0
    %276 = vmatpush1.bf16.msra.mxu0 0
    %277 = vmatprep.subr.bf16.mxu0 0
    %278 = vmatpush1.bf16.msra.mxu0 0
    %279 = vmatprep.subr.bf16.mxu0 0
    %280 = vmatpush1.bf16.msra.mxu0 0
    %281 = vmatprep.subr.bf16.mxu0 0
    %282 = vmatpush1.bf16.msra.mxu0 0
    %283 = vmatprep.subr.bf16.mxu0 0
    %284 = vmatpush1.bf16.msra.mxu0 0
    %285 = vmatprep.subr.bf16.mxu0 0
    %286 = vmatpush1.bf16.msra.mxu0 0
    %287 = vmatprep.subr.bf16.mxu0 0
    %288 = vmatpush1.bf16.msra.mxu0 0
    %289 = vmatprep.subr.bf16.mxu0 0
    %290 = vmatpush1.bf16.msra.mxu0 0
    %291 = vmatprep.mubr.bf16.mxu0 0
    %292 = vmatmul.mubr.bf16.gmra.mrb[0].mxu0 %v187
    %v293 = vpop.f32.mrb[0].mxu0
    %v294 = vadd.f32 %v209, %v293
    %v295 = vpop.f32.mrb[0].mxu0
    %v296 = vpop.f32.mrb[0].mxu0
    %v297 = vadd.f32 %v209, %v296
    %v298 = vpop.f32.mrb[0].mxu0
    %299 = vdwg.mxu0
    %300 = vst [vmem:[#allocation8] sm:$0xff] %v294
    %301 = vst [vmem:[#allocation8 + $0x8] sm:$0xff] %v297
    // Predicated region
    $region34: #{tpu_custom_call.1} parent=1 // pred_check
      _
    $region35: #{tpu_custom_call.1} parent=1 // pred_check_branch
      %303 = sbr.rel (0) target = $region37
    $region36: #{tpu_custom_call.1} parent=1 // pred_region
      %s305 = ssub.s32 256, 256
      %306 = vsyncadd [#allocation4], %s305
      %s307 = sshll.u32 [#allocation8], 4
      %s308 = int_to_ptr.vmem [resolvable:$true] %s307
      %313 = dma.vmem_to_hbm [thread:$0]  %s308, 256, %s5, [#allocation4], 128, 128, 8
    $region37: #{tpu_custom_call.1} parent=1 // pred_fallthru
      _
    // Predicated region
    $region38: #{tpu_custom_call.1} parent=1 // pred_check
      _
    $region39: #{tpu_custom_call.1} parent=1 // pred_check_branch
      %315 = sbr.rel (0) target = $region41
    $region40: #{tpu_custom_call.1} parent=1 // pred_region
      %316 = dma.done [#allocation4], 256
    $region41: #{tpu_custom_call.1} parent=1 // pred_fallthru
      _
    %317 = vsyncpa [#allocation3], 1
    %318 = vsyncpa [#allocation6], 1
    %319 = vsyncpa [#allocation4], 1

</llo_original>
